<compile_context>
chip_gen: v7x
topology: tpu7x:2x2x1
jax: 0.10.0
libtpu: 0.0.40
codegen_flags: <defaults>
</compile_context>

<pallas_src>
import jax
import jax.numpy as jnp
from jax.experimental import pallas as pl
from jax.experimental.pallas import tpu as pltpu

LANES = 128
TARGET_BLOCK_ROWS = 2048   # (2048, 128) f32 = 1 MiB per input per grid step
NUM_CORE_SPLITS = 2        # leading "parallel" axis -> 2 TCs on v7x, loop elsewhere


def _make_dice_kernel(block_rows, blocks_per_split, valid_rows, needs_mask):
    def kernel(x_ref, y_ref, inter_ref, sxy_ref, acc_i_ref, acc_s_ref):
        b = pl.program_id(1)   # reduction step within this core split ("arbitrary")

        @pl.when(b == 0)
        def _init():
            acc_i_ref[...] = jnp.zeros_like(acc_i_ref)
            acc_s_ref[...] = jnp.zeros_like(acc_s_ref)

        # Cast per-tile in VMEM (inputs are streamed in their native dtype).
        x = x_ref[...].astype(jnp.float32)
        y = y_ref[...].astype(jnp.float32)

        if needs_mask:
            # Unclamped global block index: rows at/past `valid_rows` are either
            # OOB garbage from a partial last block or a duplicated (clamped)
            # block this split must not count -> zero them before accumulating.
            c = pl.program_id(0)
            gb = c * blocks_per_split + b
            row = gb * block_rows + jax.lax.broadcasted_iota(jnp.int32, x.shape, 0)
            keep = row < valid_rows
            x = jnp.where(keep, x, 0.0)
            y = jnp.where(keep, y, 0.0)

        # Pure-VPU elementwise accumulation; single cross-lane reduce at the end.
        acc_i_ref[...] += x * y
        acc_s_ref[...] += x + y

        @pl.when(b == pl.num_programs(1) - 1)
        def _finalize():
            inter_p = jnp.sum(acc_i_ref[...])
            sxy_p = jnp.sum(acc_s_ref[...])
            # Splat the per-core partial across the whole (1, 8, 128) output
            # block (lane-dense, unmasked store); wrapper reads [:, 0, 0].
            inter_ref[...] = jnp.broadcast_to(inter_p, inter_ref.shape)
            sxy_ref[...] = jnp.broadcast_to(sxy_p, sxy_ref.shape)

    return kernel


def dice_loss(inputs, targets, smooth=1.0):
    """Pallas implementation of DiceLoss.forward."""
    x = inputs.reshape(-1)
    y = targets.reshape(-1)
    n = x.shape[0]

    # Lane alignment: only pads (and copies) when n is not a multiple of 128.
    # Zero padding does not perturb any of the sums.
    rem = n % LANES
    if rem:
        pad = LANES - rem
        x = jnp.pad(x, (0, pad))
        y = jnp.pad(y, (0, pad))
    rows = x.shape[0] // LANES
    x2d = x.reshape(rows, LANES)   # contiguous reshape: no extra HBM traffic
    y2d = y.reshape(rows, LANES)

    block_rows = rows if rows <= TARGET_BLOCK_ROWS else TARGET_BLOCK_ROWS
    n_blocks = pl.cdiv(rows, block_rows)
    blocks_per_split = pl.cdiv(n_blocks, NUM_CORE_SPLITS)
    needs_mask = (NUM_CORE_SPLITS * blocks_per_split * block_rows) != rows

    def in_index_map(c, b):
        # Clamp so duplicated trailing blocks (odd block count / core padding)
        # stay in bounds; the in-kernel row mask zeroes their contribution.
        return (jnp.minimum(c * blocks_per_split + b, n_blocks - 1), 0)

    kernel = _make_dice_kernel(block_rows, blocks_per_split, rows, needs_mask)

    partial_shape = jax.ShapeDtypeStruct((NUM_CORE_SPLITS, 8, LANES), jnp.float32)
    inter_out, sxy_out = pl.pallas_call(
        kernel,
        out_shape=(partial_shape, partial_shape),
        grid_spec=pltpu.PrefetchScalarGridSpec(
            num_scalar_prefetch=0,
            grid=(NUM_CORE_SPLITS, blocks_per_split),
            in_specs=[
                pl.BlockSpec((block_rows, LANES), in_index_map),
                pl.BlockSpec((block_rows, LANES), in_index_map),
            ],
            out_specs=[
                pl.BlockSpec((1, 8, LANES), lambda c, b: (c, 0, 0)),
                pl.BlockSpec((1, 8, LANES), lambda c, b: (c, 0, 0)),
            ],
            scratch_shapes=[
                pltpu.VMEM((block_rows, LANES), jnp.float32),
                pltpu.VMEM((block_rows, LANES), jnp.float32),
            ],
        ),
        compiler_params=pltpu.CompilerParams(
            dimension_semantics=("parallel", "arbitrary"),
        ),
    )(x2d, y2d)

    intersection = jnp.sum(inter_out[:, 0, 0])
    sum_xy = jnp.sum(sxy_out[:, 0, 0])
    dice = (2.0 * intersection + smooth) / (sum_xy + smooth)
    return 1.0 - dice


def dice_loss_ref(inputs, targets, smooth=1.0):
    x = inputs.reshape(-1).astype(jnp.float32)
    y = targets.reshape(-1).astype(jnp.float32)
    intersection = jnp.sum(x * y)
    dice = (2.0 * intersection + smooth) / (jnp.sum(x) + jnp.sum(y) + smooth)
    return 1.0 - dice


if __name__ == "__main__":
    key = jax.random.PRNGKey(0)
    k1, k2 = jax.random.split(key)

    # Typical segmentation setup: sigmoid probabilities vs. binary targets, NCHW.
    logits = jax.random.normal(k1, (2, 4, 16, 16), dtype=jnp.float32)
    inputs = jax.nn.sigmoid(logits)
    targets = (jax.random.uniform(k2, (2, 4, 16, 16)) > 0.5).astype(jnp.float32)

    loss = jax.block_until_ready(dice_loss(inputs, targets, smooth=1.0))
    ref = jax.block_until_ready(dice_loss_ref(inputs, targets, smooth=1.0))

    assert jnp.allclose(loss, ref, rtol=1e-5, atol=1e-5), (loss, ref)
    print("KERNEL_OK")
</pallas_src>

<mosaic_0001>
module attributes {stable_mosaic.version = 11 : i64} {
  func.func @kernel(%arg0: i32, %arg1: i32, %arg2: memref<16x128xf32, #tpu.memory_space<vmem>>, %arg3: memref<16x128xf32, #tpu.memory_space<vmem>>, %arg4: memref<1x8x128xf32, #tpu.memory_space<vmem>>, %arg5: memref<1x8x128xf32, #tpu.memory_space<vmem>>, %arg6: memref<16x128xf32, #tpu.memory_space<vmem>>, %arg7: memref<16x128xf32, #tpu.memory_space<vmem>>) attributes {dimension_semantics = [#tpu.dimension_semantics<parallel>, #tpu.dimension_semantics<arbitrary>], iteration_bounds = array<i64: 2, 1>, scalar_prefetch = 0 : i64, scratch_operands = 2 : i64, tpu.core_type = #tpu.core_type<tc>, window_params = [{transform_indices = @transform_0, window_bounds = array<i64: 16, 128>}, {transform_indices = @transform_1, window_bounds = array<i64: 16, 128>}, {transform_indices = @transform_2, window_bounds = array<i64: 1, 8, 128>}, {transform_indices = @transform_3, window_bounds = array<i64: 1, 8, 128>}]} {
    %c0_i32 = arith.constant 0 : i32
    %0 = arith.cmpi eq, %arg1, %c0_i32 : i32
    %1 = arith.extui %0 : i1 to i32
    %c0_i32_0 = arith.constant 0 : i32
    %2 = arith.cmpi ne, %1, %c0_i32_0 : i32
    scf.if %2 {
      %cst_16 = arith.constant 0.000000e+00 : f32
      %28 = vector.broadcast %cst_16 : f32 to vector<16x128xf32>
      %c0_17 = arith.constant 0 : index
      %c0_18 = arith.constant 0 : index
      %29 = vector.load %arg6[%c0_17, %c0_18] : memref<16x128xf32, #tpu.memory_space<vmem>>, vector<16x128xf32>
      tpu.vector_store %arg6[%c0_17, %c0_18], %28 {strides = array<i32>} : memref<16x128xf32, #tpu.memory_space<vmem>>, vector<16x128xf32>,
      %cst_19 = arith.constant 0.000000e+00 : f32
      %30 = vector.broadcast %cst_19 : f32 to vector<16x128xf32>
      %c0_20 = arith.constant 0 : index
      %c0_21 = arith.constant 0 : index
      %31 = vector.load %arg7[%c0_20, %c0_21] : memref<16x128xf32, #tpu.memory_space<vmem>>, vector<16x128xf32>
      tpu.vector_store %arg7[%c0_20, %c0_21], %30 {strides = array<i32>} : memref<16x128xf32, #tpu.memory_space<vmem>>, vector<16x128xf32>,
    } else {
    }
    %c0 = arith.constant 0 : index
    %c0_1 = arith.constant 0 : index
    %3 = vector.load %arg2[%c0, %c0_1] : memref<16x128xf32, #tpu.memory_space<vmem>>, vector<16x128xf32>
    %c0_2 = arith.constant 0 : index
    %c0_3 = arith.constant 0 : index
    %4 = vector.load %arg3[%c0_2, %c0_3] : memref<16x128xf32, #tpu.memory_space<vmem>>, vector<16x128xf32>
    %c1_i32 = arith.constant 1 : i32
    %5 = arith.muli %arg0, %c1_i32 : i32
    %6 = arith.addi %5, %arg1 : i32
    %c16_i32 = arith.constant 16 : i32
    %7 = arith.muli %6, %c16_i32 : i32
    %8 = tpu.iota {dimensions = array<i32: 0>} : vector<16x128xi32>
    %9 = vector.broadcast %7 : i32 to vector<16x128xi32>
    %10 = arith.addi %9, %8 : vector<16x128xi32>
    %c16_i32_4 = arith.constant 16 : i32
    %11 = vector.broadcast %c16_i32_4 : i32 to vector<16x128xi32>
    %12 = arith.cmpi slt, %10, %11 : vector<16x128xi32>
    %cst = arith.constant 0.000000e+00 : f32
    %13 = vector.broadcast %cst : f32 to vector<16x128xf32>
    %14 = arith.select %12, %3, %13 : vector<16x128xi1>, vector<16x128xf32>
    %cst_5 = arith.constant 0.000000e+00 : f32
    %15 = vector.broadcast %cst_5 : f32 to vector<16x128xf32>
    %16 = arith.select %12, %4, %15 : vector<16x128xi1>, vector<16x128xf32>
    %c0_6 = arith.constant 0 : index
    %c0_7 = arith.constant 0 : index
    %17 = vector.load %arg6[%c0_6, %c0_7] : memref<16x128xf32, #tpu.memory_space<vmem>>, vector<16x128xf32>
    %18 = arith.mulf %14, %16 : vector<16x128xf32>
    %19 = arith.addf %17, %18 : vector<16x128xf32>
    %c0_8 = arith.constant 0 : index
    %c0_9 = arith.constant 0 : index
    %20 = vector.load %arg6[%c0_8, %c0_9] : memref<16x128xf32, #tpu.memory_space<vmem>>, vector<16x128xf32>
    tpu.vector_store %arg6[%c0_8, %c0_9], %19 {strides = array<i32>} : memref<16x128xf32, #tpu.memory_space<vmem>>, vector<16x128xf32>,
    %c0_10 = arith.constant 0 : index
    %c0_11 = arith.constant 0 : index
    %21 = vector.load %arg7[%c0_10, %c0_11] : memref<16x128xf32, #tpu.memory_space<vmem>>, vector<16x128xf32>
    %22 = arith.addf %14, %16 : vector<16x128xf32>
    %23 = arith.addf %21, %22 : vector<16x128xf32>
    %c0_12 = arith.constant 0 : index
    %c0_13 = arith.constant 0 : index
    %24 = vector.load %arg7[%c0_12, %c0_13] : memref<16x128xf32, #tpu.memory_space<vmem>>, vector<16x128xf32>
    tpu.vector_store %arg7[%c0_12, %c0_13], %23 {strides = array<i32>} : memref<16x128xf32, #tpu.memory_space<vmem>>, vector<16x128xf32>,
    %c0_i32_14 = arith.constant 0 : i32
    %25 = arith.cmpi eq, %arg1, %c0_i32_14 : i32
    %26 = arith.extui %25 : i1 to i32
    %c0_i32_15 = arith.constant 0 : i32
    %27 = arith.cmpi ne, %26, %c0_i32_15 : i32
    scf.if %27 {
      %c0_16 = arith.constant 0 : index
      %c0_17 = arith.constant 0 : index
      %28 = vector.load %arg6[%c0_16, %c0_17] : memref<16x128xf32, #tpu.memory_space<vmem>>, vector<16x128xf32>
      %29 = vector.shape_cast %28 : vector<16x128xf32> to vector<1x16x128xf32>
      %cst_18 = arith.constant dense<0.000000e+00> : vector<1xf32>
      %30 = vector.multi_reduction <add>, %29, %cst_18 [1, 2] : vector<1x16x128xf32> to vector<1xf32>
      %31 = vector.shape_cast %30 : vector<1xf32> to vector<1x1x1xf32>
      %32 = vector.extract %31[0, 0, 0] : f32 from vector<1x1x1xf32>
      %c0_19 = arith.constant 0 : index
      %c0_20 = arith.constant 0 : index
      %33 = vector.load %arg7[%c0_19, %c0_20] : memref<16x128xf32, #tpu.memory_space<vmem>>, vector<16x128xf32>
      %34 = vector.shape_cast %33 : vector<16x128xf32> to vector<1x16x128xf32>
      %cst_21 = arith.constant dense<0.000000e+00> : vector<1xf32>
      %35 = vector.multi_reduction <add>, %34, %cst_21 [1, 2] : vector<1x16x128xf32> to vector<1xf32>
      %36 = vector.shape_cast %35 : vector<1xf32> to vector<1x1x1xf32>
      %37 = vector.extract %36[0, 0, 0] : f32 from vector<1x1x1xf32>
      %38 = vector.broadcast %32 : f32 to vector<1x8x128xf32>
      %c0_22 = arith.constant 0 : index
      %c0_23 = arith.constant 0 : index
      %c0_24 = arith.constant 0 : index
      %39 = vector.load %arg4[%c0_22, %c0_23, %c0_24] : memref<1x8x128xf32, #tpu.memory_space<vmem>>, vector<1x8x128xf32>
      tpu.vector_store %arg4[%c0_22, %c0_23, %c0_24], %38 {strides = array<i32>} : memref<1x8x128xf32, #tpu.memory_space<vmem>>, vector<1x8x128xf32>,
      %40 = vector.broadcast %37 : f32 to vector<1x8x128xf32>
      %c0_25 = arith.constant 0 : index
      %c0_26 = arith.constant 0 : index
      %c0_27 = arith.constant 0 : index
      %41 = vector.load %arg5[%c0_25, %c0_26, %c0_27] : memref<1x8x128xf32, #tpu.memory_space<vmem>>, vector<1x8x128xf32>
      tpu.vector_store %arg5[%c0_25, %c0_26, %c0_27], %40 {strides = array<i32>} : memref<1x8x128xf32, #tpu.memory_space<vmem>>, vector<1x8x128xf32>,
    } else {
    }
    return
  }
  func.func @transform_0(%arg0: i32, %arg1: i32) -> (i32, i32) {
    %c1_i32 = arith.constant 1 : i32
    %0 = arith.muli %arg0, %c1_i32 : i32
    %1 = arith.addi %0, %arg1 : i32
    %c0_i32 = arith.constant 0 : i32
    %2 = arith.minsi %1, %c0_i32 : i32
    %c0_i32_0 = arith.constant 0 : i32
    %c0_i32_1 = arith.constant 0 : i32
    return %2, %c0_i32_0 : i32, i32
  }
  func.func @transform_1(%arg0: i32, %arg1: i32) -> (i32, i32) {
    %c1_i32 = arith.constant 1 : i32
    %0 = arith.muli %arg0, %c1_i32 : i32
    %1 = arith.addi %0, %arg1 : i32
    %c0_i32 = arith.constant 0 : i32
    %2 = arith.minsi %1, %c0_i32 : i32
    %c0_i32_0 = arith.constant 0 : i32
    %c0_i32_1 = arith.constant 0 : i32
    return %2, %c0_i32_0 : i32, i32
  }
  func.func @transform_2(%arg0: i32, %arg1: i32) -> (i32, i32, i32) {
    %c0_i32 = arith.constant 0 : i32
    %c0_i32_0 = arith.constant 0 : i32
    %c0_i32_1 = arith.constant 0 : i32
    return %arg0, %c0_i32, %c0_i32_0 : i32, i32, i32
  }
  func.func @transform_3(%arg0: i32, %arg1: i32) -> (i32, i32, i32) {
    %c0_i32 = arith.constant 0 : i32
    %c0_i32_0 = arith.constant 0 : i32
    %c0_i32_1 = arith.constant 0 : i32
    return %arg0, %c0_i32, %c0_i32_0 : i32, i32, i32
  }
}

</mosaic_0001>

<llo_original>
// kernel: tpu_custom_call.1
$region0: #{tpu_custom_call.1}
  #allocation0 [shape = 'u32[]', space=smem, size = 0x4, offset = 0x4, fixed_abs, tag = 'smem constant byte address 0x4 - core index']
  #allocation1 [shape = 'u32[144,128]{1,0:T(1,128)}', space=vmem, size = 0x12000, scoped, tag = 'internal scratch']
  #allocation2 [shape = 'f32[16,128]{1,0:T(8,128)}', space=vmem, size = 0x2000, scoped, tag = 'scratch operand']
  #allocation3 [shape = 'f32[16,128]{1,0:T(8,128)}', space=vmem, size = 0x2000, scoped, tag = 'scratch operand']
  %s0 = inlined_call_operand.hbm [shape: f32[16,128], index: 0, kind: input, shape index: {}]
  %s1 = inlined_call_operand.hbm [shape: f32[16,128], index: 1, kind: input, shape index: {}]
  %s2 = inlined_call_operand.hbm [shape: f32[2,8,128], index: 2, kind: output, shape index: {0}]
  %s3 = inlined_call_operand.hbm [shape: f32[2,8,128], index: 3, kind: output, shape index: {1}]
  %4 = xla_tuple %s2, %s3
  %s5 = sld [smem:[#allocation0]]
  $region65: #{tpu_custom_call.1} parent=0
    _
  %s7 = ssub.s32 1, %s5
  %s8 = scalar_select 0, %s7, %s5
  $region1: #{tpu_custom_call.1} parent=0
    #allocation4 [shape = 'u8[16384]{0}', space=vmem, size = 0x4000, scoped, tag = 'input window, operand 0']
    #allocation5 [shape = 's32[2]{0}', space=sflag, size = 0x8, scoped, tag = 'scoped memory for tpu_custom_call.1']
    #allocation6 [shape = 's32[2]{0}', space=sflag, size = 0x8, scoped, tag = 'scoped memory for tpu_custom_call.1']
    #allocation7 [shape = 'u8[16384]{0}', space=vmem, size = 0x4000, scoped, tag = 'input window, operand 1']
    #allocation8 [shape = 's32[2]{0}', space=sflag, size = 0x8, scoped, tag = 'scoped memory for tpu_custom_call.1']
    #allocation9 [shape = 'u8[8192]{0}', space=vmem, size = 0x2000, scoped, tag = 'output window, operand 0']
    #allocation10 [shape = 'u8[8192]{0}', space=vmem, size = 0x2000, scoped, tag = 'output window, operand 1']
    #allocation11 [shape = 's32[2]{0}', space=sflag, size = 0x8, scoped, tag = 'scoped memory for tpu_custom_call.1']
    %9 = vsyncpa [#allocation5], 0
    %s10 = scalar_lea.sflag [#allocation5], 1
    %11 = vsyncpa %s10, 0
    %12 = vsyncpa [#allocation8], 0
    %s13 = scalar_lea.sflag [#allocation8], 1
    %14 = vsyncpa %s13, 0
    %15 = vsyncpa [#allocation6], 0
    %s16 = scalar_lea.sflag [#allocation6], 1
    %17 = vsyncpa %s16, 0
    %18 = vsyncpa [#allocation11], 0
    %s19 = scalar_lea.sflag [#allocation11], 1
    %20 = vsyncpa %s19, 0
    loop: start=0, step=1, limit=4
    $region2: #{tpu_custom_call.1} parent=1 // loop_pre_header
      _
    $region3: #{tpu_custom_call.1} parent=1 // loop_header
      %s22 = sphi 0, %s26
      %p23 = scmp.ge.s32.totalorder %s22, 4
      %s29 = sphi 0, %s41
      %s30 = sphi 0, %s37
      %s31 = sphi 0, %s29
      %s32 = sphi 0, %s30
      %s33 = sphi 0, %s31
      %s34 = sphi 0, %s32
      %s50 = sphi 0, %s52
      %s53 = sphi 0, %s50
      %s54 = sphi 0, %s53
      %s70 = sphi 0, %s54
      %s82 = sphi 0, %s84
      %s85 = sphi 0, %s82
      %s86 = sphi 0, %s85
      %s102 = sphi 0, %s86
      %s108 = sphi 0, %s110
      %s111 = sphi 0, %s108
      %s112 = sphi 0, %s111
      %s128 = sphi 0, %s112
      %s134 = sphi 0, %s136
      %s137 = sphi 0, %s134
      %s138 = sphi 0, %s137
      %s154 = sphi 0, %s138
    $region4: #{tpu_custom_call.1} parent=1 // loop_header_branch
      %25 = sbr.rel (%p23) target = $region8
    $region5: #{tpu_custom_call.1} parent=1 // loop_body
      %s27 = ssub.s32 %s22, 1
      %s28 = ssub.s32 %s22, 2
      %s35 = sadd.s32 1, %s30
      %p36 = scmp.ge.s32.totalorder %s35, 1
      %s37 = scalar_select %p36, 0, %s35
      %s38 = sadd.s32 1, %s29
      %s39 = scalar_select %p36, %s38, %s29
      %p40 = scmp.ge.s32.totalorder %s39, 2
      %s41 = scalar_select %p40, 0, %s39
      %s42 = sadd.s32 %s29, %s30
      %p43 = scmp.lt.s32.totalorder %s42, 0
      %s44 = scalar_select %p43, %s42, 0
      %s45 = sadd.s32 %s41, %s37
      %p46 = scmp.lt.s32.totalorder %s45, 0
      %s47 = scalar_select %p46, %s45, 0
      %s48 = ssub.s32 %s44, %s47
      %p49 = scmp.eq.s32.totalorder %s48, 0
      %s51 = sadd.s32 %s50, 1
      %s52 = scalar_select %p49, %s50, %s51
      %p55 = pneg %p49
      %p56 = scmp.eq.s32.totalorder %s22, 1
      %p57 = por %p55, %p56
      %p58 = scmp.ne.s32.totalorder %s50, %s53
      %p59 = scmp.eq.s32.totalorder %s22, 0
      %p60 = por %p58, %p59
      %p61 = scmp.ne.s32.totalorder %s50, %s53
      %p62 = scmp.eq.s32.totalorder %s27, 1
      %p63 = por %p61, %p62
      %p64 = scmp.ne.s32.totalorder %s53, %s54
      %p65 = scmp.eq.s32.totalorder %s27, 0
      %p66 = por %p64, %p65
      %p67 = scmp.ne.s32.totalorder %s53, %s54
      %p68 = scmp.eq.s32.totalorder %s28, 1
      %p69 = por %p67, %p68
      %p71 = scmp.ne.s32.totalorder %s54, %s70
      %p72 = scmp.eq.s32.totalorder %s28, 0
      %p73 = por %p71, %p72
      %s74 = sadd.s32 %s29, %s30
      %p75 = scmp.lt.s32.totalorder %s74, 0
      %s76 = scalar_select %p75, %s74, 0
      %s77 = sadd.s32 %s41, %s37
      %p78 = scmp.lt.s32.totalorder %s77, 0
      %s79 = scalar_select %p78, %s77, 0
      %s80 = ssub.s32 %s76, %s79
      %p81 = scmp.eq.s32.totalorder %s80, 0
      %s83 = sadd.s32 %s82, 1
      %s84 = scalar_select %p81, %s82, %s83
      %p87 = pneg %p81
      %p88 = scmp.eq.s32.totalorder %s22, 1
      %p89 = por %p87, %p88
      %p90 = scmp.ne.s32.totalorder %s82, %s85
      %p91 = scmp.eq.s32.totalorder %s22, 0
      %p92 = por %p90, %p91
      %p93 = scmp.ne.s32.totalorder %s82, %s85
      %p94 = scmp.eq.s32.totalorder %s27, 1
      %p95 = por %p93, %p94
      %p96 = scmp.ne.s32.totalorder %s85, %s86
      %p97 = scmp.eq.s32.totalorder %s27, 0
      %p98 = por %p96, %p97
      %p99 = scmp.ne.s32.totalorder %s85, %s86
      %p100 = scmp.eq.s32.totalorder %s28, 1
      %p101 = por %p99, %p100
      %p103 = scmp.ne.s32.totalorder %s86, %s102
      %p104 = scmp.eq.s32.totalorder %s28, 0
      %p105 = por %p103, %p104
      %s106 = ssub.s32 %s29, %s41
      %p107 = scmp.eq.s32.totalorder %s106, 0
      %s109 = sadd.s32 %s108, 1
      %s110 = scalar_select %p107, %s108, %s109
      %p113 = pneg %p107
      %p114 = scmp.eq.s32.totalorder %s22, 1
      %p115 = por %p113, %p114
      %p116 = scmp.ne.s32.totalorder %s108, %s111
      %p117 = scmp.eq.s32.totalorder %s22, 0
      %p118 = por %p116, %p117
      %p119 = scmp.ne.s32.totalorder %s108, %s111
      %p120 = scmp.eq.s32.totalorder %s27, 1
      %p121 = por %p119, %p120
      %p122 = scmp.ne.s32.totalorder %s111, %s112
      %p123 = scmp.eq.s32.totalorder %s27, 0
      %p124 = por %p122, %p123
      %p125 = scmp.ne.s32.totalorder %s111, %s112
      %p126 = scmp.eq.s32.totalorder %s28, 1
      %p127 = por %p125, %p126
      %p129 = scmp.ne.s32.totalorder %s112, %s128
      %p130 = scmp.eq.s32.totalorder %s28, 0
      %p131 = por %p129, %p130
      %s132 = ssub.s32 %s29, %s41
      %p133 = scmp.eq.s32.totalorder %s132, 0
      %s135 = sadd.s32 %s134, 1
      %s136 = scalar_select %p133, %s134, %s135
      %p139 = pneg %p133
      %p140 = scmp.eq.s32.totalorder %s22, 1
      %p141 = por %p139, %p140
      %p142 = scmp.ne.s32.totalorder %s134, %s137
      %p143 = scmp.eq.s32.totalorder %s22, 0
      %p144 = por %p142, %p143
      %p145 = scmp.ne.s32.totalorder %s134, %s137
      %p146 = scmp.eq.s32.totalorder %s27, 1
      %p147 = por %p145, %p146
      %p148 = scmp.ne.s32.totalorder %s137, %s138
      %p149 = scmp.eq.s32.totalorder %s27, 0
      %p150 = por %p148, %p149
      %p151 = scmp.ne.s32.totalorder %s137, %s138
      %p152 = scmp.eq.s32.totalorder %s28, 1
      %p153 = por %p151, %p152
      %p155 = scmp.ne.s32.totalorder %s138, %s154
      %p156 = scmp.eq.s32.totalorder %s28, 0
      %p157 = por %p155, %p156
      %p158 = scmp.le.s32.totalorder 1, %s22
      %p159 = scmp.lt.s32.totalorder %s22, 3
      %p160 = pnand %p158, %p159
      %p161 = pneg %p160
      // Predicated region
      $region9: #{tpu_custom_call.1} parent=5 // pred_check
        _
      $region10: #{tpu_custom_call.1} parent=5 // pred_check_branch
        %163 = sbr.rel (%p160) target = $region12
      $region11: #{tpu_custom_call.1} parent=5 // pred_region
        %s164 = ssub.s32 %s22, 1
      $region12: #{tpu_custom_call.1} parent=5 // pred_fallthru
        _
      %p165 = scmp.lt.s32.totalorder %s22, 2
      // Predicated region
      $region13: #{tpu_custom_call.1} parent=5 // pred_check
        %p166 = pneg %p165
      $region14: #{tpu_custom_call.1} parent=5 // pred_check_branch
        %168 = sbr.rel (%p166) target = $region16
      $region15: #{tpu_custom_call.1} parent=5 // pred_region
        // Predicated region
        $region17: #{tpu_custom_call.1} parent=15 // pred_check
          %p169 = pneg %p60
        $region18: #{tpu_custom_call.1} parent=15 // pred_check_branch
          %171 = sbr.rel (%p169) target = $region20
        $region19: #{tpu_custom_call.1} parent=15 // pred_region
          %s172 = sand.u32 %s50, 1
          %s173 = scalar_lea.sflag [#allocation5], %s172
          %s174 = sand.u32 %s50, 1
          %s175 = smul.addr %s174, 16
          %s176 = scalar_lea.vmem [#allocation4], %s175
          %s177 = sadd.s32 %s29, %s30
          %p178 = scmp.lt.s32.totalorder %s177, 0
          %s179 = scalar_select %p178, %s177, 0
          %s180 = smul.u32 2, %s179
          %s182 = ssub.s32 256, 256
          %183 = vsyncadd %s173, %s182
          %s184 = smul.addr %s180, 128
          %s185 = scalar_lea.hbm %s0, %s184
          %s186 = sshll.u32 %s176, 4
          %s187 = int_to_ptr.vmem [resolvable:$true] %s186
          %192 = dma.hbm_to_vmem [thread:$0]  %s185, 256, %s187, %s173, 128, 128, 8
        $region20: #{tpu_custom_call.1} parent=15 // pred_fallthru
          _
        // Predicated region
        $region21: #{tpu_custom_call.1} parent=15 // pred_check
          %p193 = pneg %p92
        $region22: #{tpu_custom_call.1} parent=15 // pred_check_branch
          %195 = sbr.rel (%p193) target = $region24
        $region23: #{tpu_custom_call.1} parent=15 // pred_region
          %s196 = sand.u32 %s82, 1
          %s197 = scalar_lea.sflag [#allocation8], %s196
          %s198 = sand.u32 %s82, 1
          %s199 = smul.addr %s198, 16
          %s200 = scalar_lea.vmem [#allocation7], %s199
          %s201 = sadd.s32 %s29, %s30
          %p202 = scmp.lt.s32.totalorder %s201, 0
          %s203 = scalar_select %p202, %s201, 0
          %s204 = smul.u32 2, %s203
          %s206 = ssub.s32 256, 256
          %207 = vsyncadd %s197, %s206
          %s208 = smul.addr %s204, 128
          %s209 = scalar_lea.hbm %s1, %s208
          %s210 = sshll.u32 %s200, 4
          %s211 = int_to_ptr.vmem [resolvable:$true] %s210
          %216 = dma.hbm_to_vmem [thread:$0]  %s209, 256, %s211, %s197, 128, 128, 8
        $region24: #{tpu_custom_call.1} parent=15 // pred_fallthru
          _
      $region16: #{tpu_custom_call.1} parent=5 // pred_fallthru
        _
      %p217 = scmp.le.s32.totalorder 1, %s22
      %p218 = scmp.lt.s32.totalorder %s22, 3
      %p219 = pnand %p217, %p218
      %p220 = pneg %p219
      // Predicated region
      $region25: #{tpu_custom_call.1} parent=5 // pred_check
        _
      $region26: #{tpu_custom_call.1} parent=5 // pred_check_branch
        %222 = sbr.rel (%p219) target = $region28
      $region27: #{tpu_custom_call.1} parent=5 // pred_region
        %s223 = ssub.s32 %s22, 1
        %s224 = sand.u32 %s53, 1
        %s225 = scalar_lea.sflag [#allocation5], %s224
        %s226 = sand.u32 %s53, 1
        %s227 = smul.addr %s226, 16
        %s228 = scalar_lea.vmem [#allocation4], %s227
        // Predicated region
        $region29: #{tpu_custom_call.1} parent=27 // pred_check
          %p229 = pneg %p66
        $region30: #{tpu_custom_call.1} parent=27 // pred_check_branch
          %231 = sbr.rel (%p229) target = $region32
        $region31: #{tpu_custom_call.1} parent=27 // pred_region
          %232 = dma.done %s225, 256
        $region32: #{tpu_custom_call.1} parent=27 // pred_fallthru
          _
        %s233 = sand.u32 %s85, 1
        %s234 = scalar_lea.sflag [#allocation8], %s233
        %s235 = sand.u32 %s85, 1
        %s236 = smul.addr %s235, 16
        %s237 = scalar_lea.vmem [#allocation7], %s236
        // Predicated region
        $region33: #{tpu_custom_call.1} parent=27 // pred_check
          %p238 = pneg %p98
        $region34: #{tpu_custom_call.1} parent=27 // pred_check_branch
          %240 = sbr.rel (%p238) target = $region36
        $region35: #{tpu_custom_call.1} parent=27 // pred_region
          %241 = dma.done %s234, 256
        $region36: #{tpu_custom_call.1} parent=27 // pred_fallthru
          _
        %s242 = sand.u32 %s53, 1
        %s243 = scalar_lea.sflag [#allocation5], %s242
        %s244 = sand.u32 %s53, 1
        %s245 = smul.addr %s244, 16
        %s246 = scalar_lea.vmem [#allocation4], %s245
        %p247 = pneg %p66
        %p248 = pneg %p63
        %s249 = sand.u32 %s85, 1
        %s250 = scalar_lea.sflag [#allocation8], %s249
        %s251 = sand.u32 %s85, 1
        %s252 = smul.addr %s251, 16
        %s253 = scalar_lea.vmem [#allocation7], %s252
        %p254 = pneg %p98
        %p255 = pneg %p95
        %p256 = pneg %p124
        %p257 = pneg %p121
        %s258 = sand.u32 %s111, 1
        %s259 = scalar_lea.sflag [#allocation6], %s258
        %s260 = sand.u32 %s111, 1
        %s261 = smul.addr %s260, 8
        %s262 = scalar_lea.vmem [#allocation9], %s261
        %p263 = pneg %p150
        %p264 = pneg %p147
        %s265 = sand.u32 %s137, 1
        %s266 = scalar_lea.sflag [#allocation11], %s265
        %s267 = sand.u32 %s137, 1
        %s268 = smul.addr %s267, 8
        %s269 = scalar_lea.vmem [#allocation10], %s268
        %s270 = sadd.s32 %s31, %s32
        %p271 = scmp.lt.s32.totalorder %s270, 0
        %s272 = scalar_select %p271, %s270, 0
        %s273 = smul.u32 2, %s272
        %s274 = sadd.s32 %s31, %s32
        %p275 = scmp.lt.s32.totalorder %s274, 0
        %s276 = scalar_select %p275, %s274, 0
        %s277 = smul.u32 2, %s276
        %p278 = scmp.eq.s32.totalorder %s32, 0
        // Predicated region
        $region37: #{tpu_custom_call.1} parent=27 // pred_check
          %p279 = pneg %p278
        $region38: #{tpu_custom_call.1} parent=27 // pred_check_branch
          %281 = sbr.rel (%p279) target = $region40
        $region39: #{tpu_custom_call.1} parent=27 // pred_region
          %282 = vst [vmem:[#allocation2] sm:$0xff] 0.0
          %283 = vst [vmem:[#allocation2 + $0x8] sm:$0xff] 0.0
          %284 = vst [vmem:[#allocation3] sm:$0xff] 0.0
          %285 = vst [vmem:[#allocation3 + $0x8] sm:$0xff] 0.0
        $region40: #{tpu_custom_call.1} parent=27 // pred_fallthru
          _
        %v286 = vld [vmem:[%s228] sm:$0xff]
        %v287 = vld [vmem:[%s228 + $0x8] sm:$0xff]
        %v288 = vld [vmem:[%s237] sm:$0xff]
        %v289 = vld [vmem:[%s237 + $0x8] sm:$0xff]
        %s290 = sadd.s32 %s31, %s32
        %s291 = smul.u32 %s290, 16
        %v292 = vlaneseq
        %v293 = vshrl.u32 %v292, 7
        %v294 = vadd.s32 %v293, 8
        %v295 = vstv %s291
        %v296 = vadd.s32 %v295, %v293
        %v297 = vadd.s32 %v295, %v294
        %vm298 = vcmp.lt.s32.totalorder %v296, 16
        %vm299 = vcmp.lt.s32.totalorder %v297, 16
        %v300 = vsel %vm298, %v286, 0.0
        %v301 = vsel %vm299, %v287, 0.0
        %v302 = vsel %vm298, %v288, 0.0
        %v303 = vsel %vm299, %v289, 0.0
        %v304 = vld [vmem:[#allocation2] sm:$0xff]
        %v305 = vld [vmem:[#allocation2 + $0x8] sm:$0xff]
        %v306 = vmul.f32 %v300, %v302
        %v307 = vmul.f32 %v301, %v303
        %v308 = vadd.f32 %v304, %v306
        %v309 = vadd.f32 %v305, %v307
        %310 = vst [vmem:[#allocation2] sm:$0xff] %v308
        %311 = vst [vmem:[#allocation2 + $0x8] sm:$0xff] %v309
        %v312 = vld [vmem:[#allocation3] sm:$0xff]
        %v313 = vld [vmem:[#allocation3 + $0x8] sm:$0xff]
        %v314 = vadd.f32 %v300, %v302
        %v315 = vadd.f32 %v301, %v303
        %v316 = vadd.f32 %v312, %v314
        %v317 = vadd.f32 %v313, %v315
        %318 = vst [vmem:[#allocation3] sm:$0xff] %v316
        %319 = vst [vmem:[#allocation3 + $0x8] sm:$0xff] %v317
        // Predicated region
        $region41: #{tpu_custom_call.1} parent=27 // pred_check
          %p320 = pneg %p278
        $region42: #{tpu_custom_call.1} parent=27 // pred_check_branch
          %322 = sbr.rel (%p320) target = $region44
        $region43: #{tpu_custom_call.1} parent=27 // pred_region
          %v323 = vld [vmem:[#allocation2] sm:$0xff]
          %v324 = vld [vmem:[#allocation2 + $0x8] sm:$0xff]
          %v325 = vadd.f32 %v323, %v324
          %326 = vadd.xlane.f32.xlu0 %v325
          %v327 = vpop.xlane.xlu0 %326
          %v328 = vrot.slane %v327, 4
          %v329 = vadd.f32 %v327, %v328
          %v330 = vrot.slane %v329, 2
          %v331 = vadd.f32 %v329, %v330
          %v332 = vrot.slane %v331, 1
          %v333 = vadd.f32 %v331, %v332
          %s334 = vtos %v333
          %v335 = vld [vmem:[#allocation3] sm:$0xff]
          %v336 = vld [vmem:[#allocation3 + $0x8] sm:$0xff]
          %v337 = vadd.f32 %v335, %v336
          %338 = vadd.xlane.f32.xlu0 %v337
          %v339 = vpop.xlane.xlu0 %338
          %v340 = vrot.slane %v339, 4
          %v341 = vadd.f32 %v339, %v340
          %v342 = vrot.slane %v341, 2
          %v343 = vadd.f32 %v341, %v342
          %v344 = vrot.slane %v343, 1
          %v345 = vadd.f32 %v343, %v344
          %s346 = vtos %v345
          %v347 = vstv %s334
          %348 = vst [vmem:[%s262] sm:$0xff] %v347
          %v349 = vstv %s346
          %350 = vst [vmem:[%s269] sm:$0xff] %v349
        $region44: #{tpu_custom_call.1} parent=27 // pred_fallthru
          _
        %s351 = sand.u32 %s111, 1
        %s352 = scalar_lea.sflag [#allocation6], %s351
        %s353 = sand.u32 %s111, 1
        %s354 = smul.addr %s353, 8
        %s355 = scalar_lea.vmem [#allocation9], %s354
        %s356 = sand.u32 %s137, 1
        %s357 = scalar_lea.sflag [#allocation11], %s356
        %s358 = sand.u32 %s137, 1
        %s359 = smul.addr %s358, 8
        %s360 = scalar_lea.vmem [#allocation10], %s359
        // Predicated region
        $region45: #{tpu_custom_call.1} parent=27 // pred_check
          %p361 = pneg %p121
        $region46: #{tpu_custom_call.1} parent=27 // pred_check_branch
          %363 = sbr.rel (%p361) target = $region48
        $region47: #{tpu_custom_call.1} parent=27 // pred_region
          %s365 = ssub.s32 128, 128
          %366 = vsyncadd %s352, %s365
          %s367 = smul.addr %s31, 128
          %s368 = scalar_lea.hbm %s2, %s367
          %s370 = sshll.u32 %s355, 4
          %s371 = int_to_ptr.vmem [resolvable:$true] %s370
          %373 = dma.vmem_to_hbm [thread:$0]  %s371, 128, %s368, %s352
        $region48: #{tpu_custom_call.1} parent=27 // pred_fallthru
          _
        // Predicated region
        $region49: #{tpu_custom_call.1} parent=27 // pred_check
          %p374 = pneg %p147
        $region50: #{tpu_custom_call.1} parent=27 // pred_check_branch
          %376 = sbr.rel (%p374) target = $region52
        $region51: #{tpu_custom_call.1} parent=27 // pred_region
          %s378 = ssub.s32 128, 128
          %379 = vsyncadd %s357, %s378
          %s380 = smul.addr %s31, 128
          %s381 = scalar_lea.hbm %s3, %s380
          %s383 = sshll.u32 %s360, 4
          %s384 = int_to_ptr.vmem [resolvable:$true] %s383
          %386 = dma.vmem_to_hbm [thread:$0]  %s384, 128, %s381, %s357
        $region52: #{tpu_custom_call.1} parent=27 // pred_fallthru
          _
      $region28: #{tpu_custom_call.1} parent=5 // pred_fallthru
        _
      %p387 = scmp.le.s32.totalorder 2, %s22
      // Predicated region
      $region53: #{tpu_custom_call.1} parent=5 // pred_check
        %p388 = pneg %p387
      $region54: #{tpu_custom_call.1} parent=5 // pred_check_branch
        %390 = sbr.rel (%p388) target = $region56
      $region55: #{tpu_custom_call.1} parent=5 // pred_region
        %s391 = ssub.s32 %s22, 2
        // Predicated region
        $region57: #{tpu_custom_call.1} parent=55 // pred_check
          %p392 = pneg %p127
        $region58: #{tpu_custom_call.1} parent=55 // pred_check_branch
          %394 = sbr.rel (%p392) target = $region60
        $region59: #{tpu_custom_call.1} parent=55 // pred_region
          %s395 = sand.u32 %s112, 1
          %s396 = scalar_lea.sflag [#allocation6], %s395
          %s397 = sand.u32 %s112, 1
          %s398 = smul.addr %s397, 8
          %s399 = scalar_lea.vmem [#allocation9], %s398
          %400 = dma.done %s396, 128
        $region60: #{tpu_custom_call.1} parent=55 // pred_fallthru
          _
        // Predicated region
        $region61: #{tpu_custom_call.1} parent=55 // pred_check
          %p401 = pneg %p153
        $region62: #{tpu_custom_call.1} parent=55 // pred_check_branch
          %403 = sbr.rel (%p401) target = $region64
        $region63: #{tpu_custom_call.1} parent=55 // pred_region
          %s404 = sand.u32 %s138, 1
          %s405 = scalar_lea.sflag [#allocation11], %s404
          %s406 = sand.u32 %s138, 1
          %s407 = smul.addr %s406, 8
          %s408 = scalar_lea.vmem [#allocation10], %s407
          %409 = dma.done %s405, 128
        $region64: #{tpu_custom_call.1} parent=55 // pred_fallthru
          _
      $region56: #{tpu_custom_call.1} parent=5 // pred_fallthru
        _
    $region6: #{tpu_custom_call.1} parent=1 // loop_footer
      %s26 = sadd.s32 1, %s22
    $region7: #{tpu_custom_call.1} parent=1 // loop_footer_branch
      %21 = sbr.rel target = $region3
    $region8: #{tpu_custom_call.1} parent=1 // loop_exit
      _
    %410 = vsyncpa [#allocation5], 1
    %s411 = scalar_lea.sflag [#allocation5], 1
    %412 = vsyncpa %s411, 1
    %413 = vsyncpa [#allocation8], 1
    %s414 = scalar_lea.sflag [#allocation8], 1
    %415 = vsyncpa %s414, 1
    %416 = vsyncpa [#allocation6], 1
    %s417 = scalar_lea.sflag [#allocation6], 1
    %418 = vsyncpa %s417, 1
    %419 = vsyncpa [#allocation11], 1
    %s420 = scalar_lea.sflag [#allocation11], 1
    %421 = vsyncpa %s420, 1

</llo_original>
